<compile_context>
chip_gen: v6e
topology: v6e:2x2x1
jax: 0.10.0
libtpu: 0.0.40
codegen_flags: <defaults>
</compile_context>

<pallas_src>
import functools
import math

import jax
import jax.numpy as jnp
from jax.experimental import pallas as pl
from jax.experimental.pallas import tpu as pltpu

LN_EPS = 1e-12  # BERT LayerNorm eps


# ----------------------------- generation config ---------------------------- #

def _tpu_generation():
    try:
        kind = jax.devices()[0].device_kind.lower()
    except Exception:
        return "unknown"
    if "v7" in kind:
        return "v7x"
    if "v6" in kind:
        return "v6e"
    if "v5" in kind:
        return "v5e"
    return "unknown"


_GEN = _tpu_generation()

# TODO(synk): could use pltpu.get_tpu_info().vmem_capacity_bytes instead of the
# device_kind heuristic once it is reliable at module-import time.
if _GEN in ("v5e", "v6e"):
    _VMEM_LIMIT = 96 * 1024 * 1024          # 128 MiB physical VMEM
    _RESIDENT_W_BYTES = 16 * 1024 * 1024    # keep bf16 weights fully VMEM-resident
    _MM_TK_TARGET = 512
else:  # v7x (64 MiB VMEM, 32 MiB scoped default) or unknown -> conservative
    _VMEM_LIMIT = 32 * 1024 * 1024
    _RESIDENT_W_BYTES = 0
    _MM_TK_TARGET = 256

if _GEN == "v5e":
    _ATTN_TQ, _ATTN_TKV, _BF16_EXP = 256, 256, False
elif _GEN == "v6e":
    _ATTN_TQ, _ATTN_TKV, _BF16_EXP = 512, 512, True
elif _GEN == "v7x":
    _ATTN_TQ, _ATTN_TKV, _BF16_EXP = 256, 512, True
else:
    _ATTN_TQ, _ATTN_TKV, _BF16_EXP = 256, 256, False


def _pick_tile(dim, target, align):
    """Largest `align`-multiple divisor of `dim` that is <= target, else full dim."""
    if dim <= target:
        return dim
    t = (target // align) * align
    while t >= align:
        if dim % t == 0:
            return t
        t -= align
    return dim


# ----------------------------- tiled linear (+bias, +GELU) ------------------ #

def _linear_kernel(x_ref, w_ref, b_ref, o_ref, acc_ref, *, activation):
    k = pl.program_id(2)

    @pl.when(k == 0)
    def _():
        acc_ref[...] = jnp.zeros_like(acc_ref)

    # bf16 MXU matmul, f32 accumulation.
    acc_ref[...] += jnp.dot(x_ref[...].astype(jnp.bfloat16),
                            w_ref[...].astype(jnp.bfloat16),
                            preferred_element_type=jnp.float32)

    @pl.when(k == pl.num_programs(2) - 1)
    def _():
        y = acc_ref[...] + b_ref[...].astype(jnp.float32)
        if activation == "gelu":
            # exact (erf) GELU, as in BERT
            y = 0.5 * y * (1.0 + jax.lax.erf(y * 0.7071067811865476))
        o_ref[...] = y.astype(o_ref.dtype)


def linear(x2d, w, b, activation=None):
    M, K = x2d.shape
    N = w.shape[1]
    w_bytes = K * N * jnp.dtype(w.dtype).itemsize

    tm = _pick_tile(M, 512, 8)
    if _RESIDENT_W_BYTES and w_bytes <= _RESIDENT_W_BYTES:
        # Whole (bf16) weight resident in VMEM: constant block index -> DMA'd once.
        tn, tk = N, K
    else:
        tn = _pick_tile(N, 512, 128)
        tk = _pick_tile(K, _MM_TK_TARGET, 128)

    kern = functools.partial(_linear_kernel, activation=activation)
    return pl.pallas_call(
        kern,
        out_shape=jax.ShapeDtypeStruct((M, N), x2d.dtype),
        grid=(M // tm, N // tn, K // tk),
        in_specs=[pl.BlockSpec((tm, tk), lambda i, j, k: (i, k)),
                  pl.BlockSpec((tk, tn), lambda i, j, k: (k, j)),
                  pl.BlockSpec((1, tn), lambda i, j, k: (0, j))],
        out_specs=pl.BlockSpec((tm, tn), lambda i, j, k: (i, j)),
        scratch_shapes=[pltpu.VMEM((tm, tn), jnp.float32)],
        compiler_params=pltpu.CompilerParams(
            dimension_semantics=("parallel", "parallel", "arbitrary"),
            vmem_limit_bytes=_VMEM_LIMIT),
    )(x2d, w, b.reshape(1, N))


# --------------- tiled linear fused with residual-add + LayerNorm ----------- #

def _linear_add_ln_kernel(x_ref, w_ref, b_ref, r_ref, g_ref, be_ref, o_ref, acc_ref):
    k = pl.program_id(1)

    @pl.when(k == 0)
    def _():
        acc_ref[...] = jnp.zeros_like(acc_ref)

    acc_ref[...] += jnp.dot(x_ref[...].astype(jnp.bfloat16),
                            w_ref[...].astype(jnp.bfloat16),
                            preferred_element_type=jnp.float32)

    @pl.when(k == pl.num_programs(1) - 1)
    def _():
        h = (acc_ref[...] + b_ref[...].astype(jnp.float32)
             + r_ref[...].astype(jnp.float32))
        mean = jnp.mean(h, axis=-1, keepdims=True)
        c = h - mean
        var = jnp.mean(c * c, axis=-1, keepdims=True)
        y = c * jax.lax.rsqrt(var + LN_EPS)
        o_ref[...] = (y * g_ref[...].astype(jnp.float32)
                      + be_ref[...].astype(jnp.float32)).astype(o_ref.dtype)


def linear_add_layernorm(x2d, w, b, residual2d, gamma, beta):
    """out = LayerNorm(x2d @ w + b + residual2d); LN over the full N dim."""
    M, K = x2d.shape
    N = w.shape[1]
    w_bytes = K * N * jnp.dtype(w.dtype).itemsize

    tm = _pick_tile(M, 512, 8)
    if _RESIDENT_W_BYTES and w_bytes <= _RESIDENT_W_BYTES:
        tk = K                                   # whole weight resident, DMA'd once
    else:
        tk = _pick_tile(K, _MM_TK_TARGET, 128)

    return pl.pallas_call(
        _linear_add_ln_kernel,
        out_shape=jax.ShapeDtypeStruct((M, N), x2d.dtype),
        grid=(M // tm, K // tk),
        in_specs=[pl.BlockSpec((tm, tk), lambda i, k: (i, k)),
                  pl.BlockSpec((tk, N), lambda i, k: (k, 0)),
                  pl.BlockSpec((1, N), lambda i, k: (0, 0)),
                  pl.BlockSpec((tm, N), lambda i, k: (i, 0)),
                  pl.BlockSpec((1, N), lambda i, k: (0, 0)),
                  pl.BlockSpec((1, N), lambda i, k: (0, 0))],
        out_specs=pl.BlockSpec((tm, N), lambda i, k: (i, 0)),
        scratch_shapes=[pltpu.VMEM((tm, N), jnp.float32)],
        compiler_params=pltpu.CompilerParams(
            dimension_semantics=("parallel", "arbitrary"),
            vmem_limit_bytes=_VMEM_LIMIT),
    )(x2d, w, b.reshape(1, N), residual2d, gamma.reshape(1, N), beta.reshape(1, N))


# --------------------- flash-style multi-head self-attention ---------------- #

def _flash_attn_kernel(q_ref, k_ref, v_ref, mask_ref, hm_ref, o_ref,
                       m_sc, l_sc, acc_sc, *, nh, dh, scale, bf16_exp):
    ki = pl.program_id(2)

    @pl.when(ki == 0)
    def _():
        m_sc[...] = jnp.full_like(m_sc, -1e30)
        l_sc[...] = jnp.zeros_like(l_sc)
        acc_sc[...] = jnp.zeros_like(acc_sc)

    mask = mask_ref[...].astype(jnp.float32)          # (1, tkv), additive

    # Full lane-dense loads once per step; bf16 operands for the MXU.
    q_all = q_ref[...].astype(jnp.bfloat16)           # (tq, H)
    k_all = k_ref[...].astype(jnp.bfloat16)           # (tkv, H)
    v_all = v_ref[...].astype(jnp.bfloat16)           # (tkv, H)

    # Read running max / denom once per KV step (coalesced, lane-dense).
    m_prev_all = m_sc[...]                            # (tq, nh)
    l_prev_all = l_sc[...]                            # (tq, nh)
    m_cols, l_cols = [], []

    # All heads of this (batch, q-tile) handled here: keeps I/O H-wide.
    for h in range(nh):
        lo, hi = h * dh, (h + 1) * dh
        qh = q_all[:, lo:hi]                          # (tq, dh)  bf16
        kh = k_all[:, lo:hi]                          # (tkv, dh) bf16
        vh = v_all[:, lo:hi]                          # (tkv, dh) bf16

        # Contract on dh directly (no kh.T -> no XLU transpose); f32 accumulate.
        s = jax.lax.dot_general(qh, kh, (((1,), (1,)), ((), ())),
                                preferred_element_type=jnp.float32) * scale
        s = s + mask                                  # (tq, tkv) f32

        m_prev = m_prev_all[:, h:h + 1]               # (tq, 1)
        m_new = jnp.maximum(m_prev, jnp.max(s, axis=-1, keepdims=True))
        alpha = jnp.exp(m_prev - m_new)
        sm = s - m_new
        if bf16_exp:
            p = jnp.exp(sm.astype(jnp.bfloat16))      # bf16 EUP, feeds bf16 PV matmul
        else:
            p = jnp.exp(sm).astype(jnp.bfloat16)
        p_sum = jnp.sum(p.astype(jnp.float32), axis=-1, keepdims=True)

        pv = jnp.dot(p, vh, preferred_element_type=jnp.float32)   # (tq, dh) f32

        l_cols.append(alpha * l_prev_all[:, h:h + 1] + p_sum)
        m_cols.append(m_new)
        acc_sc[:, lo:hi] = alpha * acc_sc[:, lo:hi] + pv

    # Single lane-dense write-back per KV step instead of 3*nh 1-lane RMWs.
    m_sc[...] = jnp.concatenate(m_cols, axis=-1)
    l_sc[...] = jnp.concatenate(l_cols, axis=-1)

    @pl.when(ki == pl.num_programs(2) - 1)
    def _():
        # Normalize in place, then one full-width store (no concatenate copy).
        # head_mask is applied as a per-head scalar on the normalized context;
        # equivalent to the reference only for per-head scalar masks.
        for h in range(nh):
            lo, hi = h * dh, (h + 1) * dh
            inv = 1.0 / l_sc[:, h:h + 1]              # exact for parity
            acc_sc[:, lo:hi] = acc_sc[:, lo:hi] * (inv * hm_ref[h])
        o_ref[...] = acc_sc[...].astype(o_ref.dtype)


def attention_from_qkv(qkv3d, mask_add, head_scale, num_heads):
    """qkv3d: (B, S, 3H) packed [q | k | v]; mask_add: (B, 1, S) additive mask."""
    B, S, threeH = qkv3d.shape
    H = threeH // 3
    DH = H // num_heads
    tq = _pick_tile(S, _ATTN_TQ, 8)
    tkv = _pick_tile(S, _ATTN_TKV, 128)
    kern = functools.partial(_flash_attn_kernel, nh=num_heads, dh=DH,
                             scale=1.0 / math.sqrt(DH), bf16_exp=_BF16_EXP)
    return pl.pallas_call(
        kern,
        out_shape=jax.ShapeDtypeStruct((B, S, H), qkv3d.dtype),
        grid=(B, S // tq, S // tkv),
        in_specs=[
            # q / k / v are H-wide slabs (block index 0 / 1 / 2) of the packed qkv.
            pl.BlockSpec((None, tq, H), lambda b, qi, ki: (b, qi, 0)),
            pl.BlockSpec((None, tkv, H), lambda b, qi, ki: (b, ki, 1)),
            pl.BlockSpec((None, tkv, H), lambda b, qi, ki: (b, ki, 2)),
            pl.BlockSpec((None, 1, tkv), lambda b, qi, ki: (b, 0, ki)),
            pl.BlockSpec(memory_space=pltpu.MemorySpace.SMEM),   # per-head scale
        ],
        out_specs=pl.BlockSpec((None, tq, H), lambda b, qi, ki: (b, qi, 0)),
        scratch_shapes=[
            pltpu.VMEM((tq, num_heads), jnp.float32),   # running max
            pltpu.VMEM((tq, num_heads), jnp.float32),   # running denom
            pltpu.VMEM((tq, H), jnp.float32),           # running context
        ],
        compiler_params=pltpu.CompilerParams(
            dimension_semantics=("parallel", "parallel", "arbitrary"),
            vmem_limit_bytes=_VMEM_LIMIT),
    )(qkv3d, qkv3d, qkv3d, mask_add, head_scale)


# ----------------------------- mix (lerp) kernel ---------------------------- #

def _mix_kernel(l_ref, x_ref, y_ref, o_ref):
    lv = l_ref[0]
    xf = x_ref[...].astype(jnp.float32)
    yf = y_ref[...].astype(jnp.float32)
    o_ref[...] = (lv * xf + (1.0 - lv) * yf).astype(o_ref.dtype)


def mix_hidden(x, y, l, tm=512):
    """hidden = l * x + (1 - l) * y, computed in f32, row-tiled."""
    B, S, H = x.shape
    M = B * S
    tm = _pick_tile(M, tm, 8)
    x2d = x.reshape(M, H)
    y2d = y.reshape(M, H)
    l_arr = jnp.asarray(l, jnp.float32).reshape(1)
    out = pl.pallas_call(
        _mix_kernel,
        out_shape=jax.ShapeDtypeStruct((M, H), x.dtype),
        grid=(M // tm,),
        in_specs=[pl.BlockSpec(memory_space=pltpu.MemorySpace.SMEM),
                  pl.BlockSpec((tm, H), lambda i: (i, 0)),
                  pl.BlockSpec((tm, H), lambda i: (i, 0))],
        out_specs=pl.BlockSpec((tm, H), lambda i: (i, 0)),
        compiler_params=pltpu.CompilerParams(
            dimension_semantics=("parallel",),
            vmem_limit_bytes=_VMEM_LIMIT),
    )(l_arr, x2d, y2d)
    return out.reshape(B, S, H)


# ----------------------------- BERT layer / encoder ------------------------- #

def _to_additive_mask(attention_mask, B, S):
    """Accepts None, a (B, S) 0/1 mask, or an extended additive (B,1,[1,]S) mask."""
    if attention_mask is None:
        return jnp.zeros((B, 1, S), jnp.float32)
    m = jnp.asarray(attention_mask, jnp.float32)
    if m.ndim == 2:                        # (B, S) 0/1 -> additive
        m = (1.0 - m) * -10000.0
    return m.reshape(B, 1, S)


def bert_layer_forward(p, hidden, attention_mask, head_mask=None):
    """One BertLayer (self-attention + FFN), dropout = identity (eval mode)."""
    B, S, H = hidden.shape
    NH = p["num_heads"]

    mask_add = _to_additive_mask(attention_mask, B, S)
    if head_mask is None:
        head_scale = jnp.ones((NH,), jnp.float32)
    else:
        head_scale = jnp.asarray(head_mask, jnp.float32).reshape(NH)

    x2d = hidden.reshape(B * S, H)

    # fused QKV projection -> (B, S, 3H), consumed directly by the attention kernel
    qkv = linear(x2d, p["qkv_w"], p["qkv_b"]).reshape(B, S, 3 * H)
    ctx = attention_from_qkv(qkv, mask_add, head_scale, NH)        # (B, S, H)
    ctx2d = ctx.reshape(B * S, H)

    # attention output projection fused with residual-add + LayerNorm
    attn_out = linear_add_layernorm(ctx2d, p["ao_w"], p["ao_b"],
                                    x2d, p["ln1_g"], p["ln1_b"])

    # FFN: intermediate (GELU fused) then output projection fused with add + LN
    inter = linear(attn_out, p["i_w"], p["i_b"], activation="gelu")
    out = linear_add_layernorm(inter, p["o_w"], p["o_b"],
                               attn_out, p["ln2_g"], p["ln2_b"])
    return out.reshape(B, S, H)


def bert_encoder4mix_forward(layer_params, hidden_states, hidden_states2=None, l=None,
                             mix_layer=1000, attention_mask=None, attention_mask2=None,
                             head_mask=None, output_hidden_states=True,
                             output_attentions=False):
    """Mirrors BertEncoder4Mix.forward semantics."""
    # TODO(synk): output_attentions requires materializing attention probabilities,
    # which the flash-style kernel deliberately avoids; keep output_attentions=False.
    all_hidden_states = ()

    if mix_layer == -1:
        if hidden_states2 is not None:
            hidden_states = mix_hidden(hidden_states, hidden_states2, l)

    for i, p in enumerate(layer_params):
        hm = head_mask[i] if head_mask is not None else None
        if i <= mix_layer:
            if output_hidden_states:
                all_hidden_states = all_hidden_states + (hidden_states,)
            hidden_states = bert_layer_forward(p, hidden_states, attention_mask, hm)
            if hidden_states2 is not None:
                hidden_states2 = bert_layer_forward(p, hidden_states2, attention_mask2, hm)
        if i == mix_layer:
            if hidden_states2 is not None:
                hidden_states = mix_hidden(hidden_states, hidden_states2, l)
        if i > mix_layer:
            if output_hidden_states:
                all_hidden_states = all_hidden_states + (hidden_states,)
            hidden_states = bert_layer_forward(p, hidden_states, attention_mask, hm)

    if output_hidden_states:
        all_hidden_states = all_hidden_states + (hidden_states,)

    outputs = (hidden_states,)
    if output_hidden_states:
        outputs = outputs + (all_hidden_states,)
    return outputs


# ----------------------------- parameter init ------------------------------- #

def init_layer_params(key, H, I, NH):
    ks = jax.random.split(key, 6)
    std = 0.02

    def n(k, shp):
        return jax.random.normal(k, shp, jnp.float32) * std

    q_w, k_w, v_w = n(ks[0], (H, H)), n(ks[1], (H, H)), n(ks[2], (H, H))
    # Weights stored in bf16 (MXU-native, half the HBM traffic); biases/LN in f32.
    return {
        "num_heads": NH,
        # packed [q | k | v] projection
        "qkv_w": jnp.concatenate([q_w, k_w, v_w], axis=1).astype(jnp.bfloat16),  # (H, 3H)
        "qkv_b": jnp.zeros((3 * H,), jnp.float32),
        "ao_w": n(ks[3], (H, H)).astype(jnp.bfloat16),
        "ao_b": jnp.zeros((H,), jnp.float32),
        "ln1_g": jnp.ones((H,), jnp.float32), "ln1_b": jnp.zeros((H,), jnp.float32),
        "i_w": n(ks[4], (H, I)).astype(jnp.bfloat16),
        "i_b": jnp.zeros((I,), jnp.float32),
        "o_w": n(ks[5], (I, H)).astype(jnp.bfloat16),
        "o_b": jnp.zeros((H,), jnp.float32),
        "ln2_g": jnp.ones((H,), jnp.float32), "ln2_b": jnp.zeros((H,), jnp.float32),
    }


# ----------------------------- demo ----------------------------------------- #

if __name__ == "__main__":
    # small but lane-aligned shapes (H multiple of 128 so head/QKV slabs tile cleanly)
    B, S, H, NH, I, L = 2, 8, 128, 4, 256, 2

    key = jax.random.PRNGKey(0)
    k_params, k_h1, k_h2 = jax.random.split(key, 3)
    layer_keys = jax.random.split(k_params, L)
    layers = [init_layer_params(layer_keys[i], H, I, NH) for i in range(L)]

    hidden = jax.random.normal(k_h1, (B, S, H), jnp.float32)
    hidden2 = jax.random.normal(k_h2, (B, S, H), jnp.float32)

    # extended additive attention masks (B, 1, 1, S): 0.0 = attend, -10000.0 = masked
    valid = jnp.ones((B, S), jnp.float32)
    valid = valid.at[1, -2:].set(0.0)
    attn_mask = ((1.0 - valid) * -10000.0).reshape(B, 1, 1, S)
    attn_mask2 = jnp.zeros((B, 1, 1, S), jnp.float32)

    head_mask = [None] * L

    outputs = bert_encoder4mix_forward(
        layers, hidden, hidden_states2=hidden2, l=0.7, mix_layer=0,
        attention_mask=attn_mask, attention_mask2=attn_mask2,
        head_mask=head_mask, output_hidden_states=True, output_attentions=False)

    final_hidden = outputs[0]
    jax.block_until_ready(final_hidden)
    assert final_hidden.shape == (B, S, H)
    assert len(outputs[1]) == L + 1  # all_hidden_states
    print("KERNEL_OK")
</pallas_src>

<mosaic_0001>
module attributes {stable_mosaic.version = 11 : i64} {
  func.func @_linear_kernel(%arg0: i32, %arg1: i32, %arg2: i32, %arg3: memref<16x128xf32, #tpu.memory_space<vmem>>, %arg4: memref<128x384xbf16, #tpu.memory_space<vmem>>, %arg5: memref<1x384xf32, #tpu.memory_space<vmem>>, %arg6: memref<16x384xf32, #tpu.memory_space<vmem>>, %arg7: memref<16x384xf32, #tpu.memory_space<vmem>>) attributes {dimension_semantics = [#tpu.dimension_semantics<parallel>, #tpu.dimension_semantics<parallel>, #tpu.dimension_semantics<arbitrary>], iteration_bounds = array<i64: 1, 1, 1>, scalar_prefetch = 0 : i64, scratch_operands = 1 : i64, tpu.core_type = #tpu.core_type<tc>, window_params = [{transform_indices = @transform_0, window_bounds = array<i64: 16, 128>}, {transform_indices = @transform_1, window_bounds = array<i64: 128, 384>}, {transform_indices = @transform_2, window_bounds = array<i64: 1, 384>}, {transform_indices = @transform_3, window_bounds = array<i64: 16, 384>}]} {
    %c0_i32 = arith.constant 0 : i32
    %0 = arith.cmpi eq, %arg2, %c0_i32 : i32
    %1 = arith.extui %0 : i1 to i32
    %c0_i32_0 = arith.constant 0 : i32
    %2 = arith.cmpi ne, %1, %c0_i32_0 : i32
    scf.if %2 {
      %cst_10 = arith.constant 0.000000e+00 : f32
      %13 = vector.broadcast %cst_10 : f32 to vector<16x384xf32>
      %c0_11 = arith.constant 0 : index
      %c0_12 = arith.constant 0 : index
      %14 = vector.load %arg7[%c0_11, %c0_12] : memref<16x384xf32, #tpu.memory_space<vmem>>, vector<16x384xf32>
      tpu.vector_store %arg7[%c0_11, %c0_12], %13 {strides = array<i32>} : memref<16x384xf32, #tpu.memory_space<vmem>>, vector<16x384xf32>,
    } else {
    }
    %c0 = arith.constant 0 : index
    %c0_1 = arith.constant 0 : index
    %3 = vector.load %arg7[%c0, %c0_1] : memref<16x384xf32, #tpu.memory_space<vmem>>, vector<16x384xf32>
    %c0_2 = arith.constant 0 : index
    %c0_3 = arith.constant 0 : index
    %4 = vector.load %arg3[%c0_2, %c0_3] : memref<16x128xf32, #tpu.memory_space<vmem>>, vector<16x128xf32>
    %5 = arith.truncf %4 : vector<16x128xf32> to vector<16x128xbf16>
    %c0_4 = arith.constant 0 : index
    %c0_5 = arith.constant 0 : index
    %6 = vector.load %arg4[%c0_4, %c0_5] : memref<128x384xbf16, #tpu.memory_space<vmem>>, vector<128x384xbf16>
    %cst = arith.constant dense<0.000000e+00> : vector<16x384xf32>
    %7 = tpu.matmul %5, %6, %cst {dimension_numbers = #tpu.dot_dimension_numbers<[1], [0], [0], [1], [0, 0, 1, 1], [], []>} : vector<16x128xbf16>, vector<128x384xbf16>, vector<16x384xf32> -> vector<16x384xf32>
    %8 = arith.addf %3, %7 : vector<16x384xf32>
    %c0_6 = arith.constant 0 : index
    %c0_7 = arith.constant 0 : index
    %9 = vector.load %arg7[%c0_6, %c0_7] : memref<16x384xf32, #tpu.memory_space<vmem>>, vector<16x384xf32>
    tpu.vector_store %arg7[%c0_6, %c0_7], %8 {strides = array<i32>} : memref<16x384xf32, #tpu.memory_space<vmem>>, vector<16x384xf32>,
    %c0_i32_8 = arith.constant 0 : i32
    %10 = arith.cmpi eq, %arg2, %c0_i32_8 : i32
    %11 = arith.extui %10 : i1 to i32
    %c0_i32_9 = arith.constant 0 : i32
    %12 = arith.cmpi ne, %11, %c0_i32_9 : i32
    scf.if %12 {
      %c0_10 = arith.constant 0 : index
      %c0_11 = arith.constant 0 : index
      %13 = vector.load %arg7[%c0_10, %c0_11] : memref<16x384xf32, #tpu.memory_space<vmem>>, vector<16x384xf32>
      %c0_12 = arith.constant 0 : index
      %c0_13 = arith.constant 0 : index
      %14 = vector.load %arg5[%c0_12, %c0_13] : memref<1x384xf32, #tpu.memory_space<vmem>>, vector<1x384xf32>
      %15 = vector.broadcast %14 : vector<1x384xf32> to vector<16x384xf32>
      %16 = arith.addf %13, %15 : vector<16x384xf32>
      %c0_14 = arith.constant 0 : index
      %c0_15 = arith.constant 0 : index
      %17 = vector.load %arg6[%c0_14, %c0_15] : memref<16x384xf32, #tpu.memory_space<vmem>>, vector<16x384xf32>
      tpu.vector_store %arg6[%c0_14, %c0_15], %16 {strides = array<i32>} : memref<16x384xf32, #tpu.memory_space<vmem>>, vector<16x384xf32>,
    } else {
    }
    return
  }
  func.func @transform_0(%arg0: i32, %arg1: i32, %arg2: i32) -> (i32, i32) {
    %c0_i32 = arith.constant 0 : i32
    return %arg0, %arg2 : i32, i32
  }
  func.func @transform_1(%arg0: i32, %arg1: i32, %arg2: i32) -> (i32, i32) {
    %c0_i32 = arith.constant 0 : i32
    return %arg2, %arg1 : i32, i32
  }
  func.func @transform_2(%arg0: i32, %arg1: i32, %arg2: i32) -> (i32, i32) {
    %c0_i32 = arith.constant 0 : i32
    %c0_i32_0 = arith.constant 0 : i32
    return %c0_i32, %arg1 : i32, i32
  }
  func.func @transform_3(%arg0: i32, %arg1: i32, %arg2: i32) -> (i32, i32) {
    %c0_i32 = arith.constant 0 : i32
    return %arg0, %arg1 : i32, i32
  }
}

</mosaic_0001>

<llo_original>
// kernel: tpu_custom_call.1
$region0: #{tpu_custom_call.1}
  #allocation0 [shape = 'u32[]', space=smem, size = 0x4, offset = 0x4, fixed_abs, tag = 'smem constant byte address 0x4 - core index']
  #allocation1 [shape = 'u32[144,128]{1,0:T(1,128)}', space=vmem, size = 0x12000, scoped, tag = 'internal scratch']
  #allocation2 [shape = 'f32[16,384]{1,0:T(8,128)}', space=vmem, size = 0x6000, scoped, tag = 'scratch operand']
  %s0 = inlined_call_operand.hbm [shape: f32[16,128], index: 0, kind: input, shape index: {}]
  %s1 = inlined_call_operand.hbm [shape: bf16[128,384], index: 1, kind: input, shape index: {}]
  %s2 = inlined_call_operand.vmem [shape: f32[1,384], index: 2, kind: input, shape index: {}]
  %s3 = inlined_call_operand.hbm [shape: f32[16,384], index: 3, kind: output, shape index: {}]
  %s4 = sld [smem:[#allocation0]]
  $region38: #{tpu_custom_call.1} parent=0
    _
  %s6 = ssub.s32 1, %s4
  %s7 = scalar_select 0, %s6, %s4
  $region1: #{tpu_custom_call.1} parent=0
    #allocation3 [shape = 'u8[8192]{0}', space=vmem, size = 0x2000, scoped, tag = 'input window, operand 0, single buffered']
    #allocation4 [shape = 's32[1]{0}', space=sflag, size = 0x4, scoped, tag = 'scoped memory for tpu_custom_call.1']
    #allocation5 [shape = 's32[1]{0}', space=sflag, size = 0x4, scoped, tag = 'scoped memory for tpu_custom_call.1']
    #allocation6 [shape = 'u8[98304]{0}', space=vmem, size = 0x18000, scoped, tag = 'input window, operand 1, single buffered']
    #allocation7 [shape = 's32[1]{0}', space=sflag, size = 0x4, scoped, tag = 'scoped memory for tpu_custom_call.1']
    #allocation8 [shape = 'u8[24576]{0}', space=vmem, size = 0x6000, scoped, tag = 'output window, operand 0, single buffered']
    %8 = vsyncpa [#allocation4], 0
    %9 = vsyncpa [#allocation7], 0
    %10 = vsyncpa [#allocation5], 0
    // Predicated region
    $region2: #{tpu_custom_call.1} parent=1 // pred_check
      _
    $region3: #{tpu_custom_call.1} parent=1 // pred_check_branch
      %12 = sbr.rel (0) target = $region5
    $region4: #{tpu_custom_call.1} parent=1 // pred_region
      %s14 = ssub.s32 256, 256
      %15 = vsyncadd [#allocation4], %s14
      %s16 = sshll.u32 [#allocation3], 4
      %s17 = int_to_ptr.vmem [resolvable:$true] %s16
      %22 = dma.hbm_to_vmem [thread:$0]  %s0, 256, %s17, [#allocation4], 128, 128, 8
    $region5: #{tpu_custom_call.1} parent=1 // pred_fallthru
      _
    // Predicated region
    $region6: #{tpu_custom_call.1} parent=1 // pred_check
      _
    $region7: #{tpu_custom_call.1} parent=1 // pred_check_branch
      %24 = sbr.rel (0) target = $region9
    $region8: #{tpu_custom_call.1} parent=1 // pred_region
      %s26 = ssub.s32 3072, 3072
      %27 = vsyncadd [#allocation7], %s26
      %s28 = sshll.u32 [#allocation6], 4
      %s29 = int_to_ptr.vmem [resolvable:$true] %s28
      %34 = dma.hbm_to_vmem [thread:$0]  %s1, 3072, %s29, [#allocation7], 192, 192, 12
    $region9: #{tpu_custom_call.1} parent=1 // pred_fallthru
      _
    // Predicated region
    $region10: #{tpu_custom_call.1} parent=1 // pred_check
      _
    $region11: #{tpu_custom_call.1} parent=1 // pred_check_branch
      %36 = sbr.rel (0) target = $region13
    $region12: #{tpu_custom_call.1} parent=1 // pred_region
      _
    $region13: #{tpu_custom_call.1} parent=1 // pred_fallthru
      _
    // Predicated region
    $region14: #{tpu_custom_call.1} parent=1 // pred_check
      _
    $region15: #{tpu_custom_call.1} parent=1 // pred_check_branch
      %38 = sbr.rel (0) target = $region17
    $region16: #{tpu_custom_call.1} parent=1 // pred_region
      %39 = dma.done [#allocation4], 256
    $region17: #{tpu_custom_call.1} parent=1 // pred_fallthru
      _
    // Predicated region
    $region18: #{tpu_custom_call.1} parent=1 // pred_check
      _
    $region19: #{tpu_custom_call.1} parent=1 // pred_check_branch
      %41 = sbr.rel (0) target = $region21
    $region20: #{tpu_custom_call.1} parent=1 // pred_region
      %42 = dma.done [#allocation7], 3072
    $region21: #{tpu_custom_call.1} parent=1 // pred_fallthru
      _
    %p44 = scmp.eq.s32.totalorder 0, 0
    // Predicated region
    $region22: #{tpu_custom_call.1} parent=1 // pred_check
      %p45 = pneg %p44
    $region23: #{tpu_custom_call.1} parent=1 // pred_check_branch
      %47 = sbr.rel (%p45) target = $region25
    $region24: #{tpu_custom_call.1} parent=1 // pred_region
      %48 = vst [vmem:[#allocation2] sm:$0xff] 0.0
      %49 = vst [vmem:[#allocation2 + $0x8] sm:$0xff] 0.0
      %50 = vst [vmem:[#allocation2 + $0x10] sm:$0xff] 0.0
      %51 = vst [vmem:[#allocation2 + $0x18] sm:$0xff] 0.0
      %52 = vst [vmem:[#allocation2 + $0x20] sm:$0xff] 0.0
      %53 = vst [vmem:[#allocation2 + $0x28] sm:$0xff] 0.0
    $region25: #{tpu_custom_call.1} parent=1 // pred_fallthru
      _
    %v54 = vld [vmem:[#allocation2] sm:$0xff]
    %v55 = vld [vmem:[#allocation2 + $0x8] sm:$0xff]
    %v56 = vld [vmem:[#allocation2 + $0x10] sm:$0xff]
    %v57 = vld [vmem:[#allocation2 + $0x18] sm:$0xff]
    %v58 = vld [vmem:[#allocation2 + $0x20] sm:$0xff]
    %v59 = vld [vmem:[#allocation2 + $0x28] sm:$0xff]
    %v60 = vld [vmem:[#allocation3] sm:$0xff]
    %v61 = vld [vmem:[#allocation3 + $0x8] sm:$0xff]
    %v62 = vpack.c.bf16 %v61, %v60
    %v63 = vld [vmem:[#allocation6] sm:$0xff]
    %v64 = vld [vmem:[#allocation6 + $0x8] sm:$0xf]
    %v65 = vld [vmem:[#allocation6 + $0xc] sm:$0xff]
    %v66 = vld [vmem:[#allocation6 + $0x14] sm:$0xf]
    %v67 = vld [vmem:[#allocation6 + $0x18] sm:$0xff]
    %v68 = vld [vmem:[#allocation6 + $0x20] sm:$0xf]
    %v69 = vld [vmem:[#allocation6 + $0x24] sm:$0xff]
    %v70 = vld [vmem:[#allocation6 + $0x2c] sm:$0xf]
    %v71 = vld [vmem:[#allocation6 + $0x30] sm:$0xff]
    %v72 = vld [vmem:[#allocation6 + $0x38] sm:$0xf]
    %v73 = vld [vmem:[#allocation6 + $0x3c] sm:$0xff]
    %v74 = vld [vmem:[#allocation6 + $0x44] sm:$0xf]
    %v75 = vld [vmem:[#allocation6 + $0x48] sm:$0xff]
    %v76 = vld [vmem:[#allocation6 + $0x50] sm:$0xf]
    %v77 = vld [vmem:[#allocation6 + $0x54] sm:$0xff]
    %v78 = vld [vmem:[#allocation6 + $0x5c] sm:$0xf]
    %v79 = vld [vmem:[#allocation6 + $0x60] sm:$0xff]
    %v80 = vld [vmem:[#allocation6 + $0x68] sm:$0xf]
    %v81 = vld [vmem:[#allocation6 + $0x6c] sm:$0xff]
    %v82 = vld [vmem:[#allocation6 + $0x74] sm:$0xf]
    %v83 = vld [vmem:[#allocation6 + $0x78] sm:$0xff]
    %v84 = vld [vmem:[#allocation6 + $0x80] sm:$0xf]
    %v85 = vld [vmem:[#allocation6 + $0x84] sm:$0xff]
    %v86 = vld [vmem:[#allocation6 + $0x8c] sm:$0xf]
    %v87 = vld [vmem:[#allocation6 + $0x90] sm:$0xff]
    %v88 = vld [vmem:[#allocation6 + $0x98] sm:$0xf]
    %v89 = vld [vmem:[#allocation6 + $0x9c] sm:$0xff]
    %v90 = vld [vmem:[#allocation6 + $0xa4] sm:$0xf]
    %v91 = vld [vmem:[#allocation6 + $0xa8] sm:$0xff]
    %v92 = vld [vmem:[#allocation6 + $0xb0] sm:$0xf]
    %v93 = vld [vmem:[#allocation6 + $0xb4] sm:$0xff]
    %v94 = vld [vmem:[#allocation6 + $0xbc] sm:$0xf]
    %v127 = vunpack.c.l.b16 %v63
    %v128 = vunpack.c.h.b16 %v63
    %v129 = vunpack.c.l.b16 %v64
    %v130 = vunpack.c.l.b16 %v65
    %v131 = vunpack.c.h.b16 %v65
    %v132 = vunpack.c.l.b16 %v66
    %v133 = vunpack.c.l.b16 %v67
    %v134 = vunpack.c.h.b16 %v67
    %v135 = vunpack.c.l.b16 %v68
    %v136 = vunpack.c.l.b16 %v69
    %v137 = vunpack.c.h.b16 %v69
    %v138 = vunpack.c.l.b16 %v70
    %v139 = vunpack.c.l.b16 %v71
    %v140 = vunpack.c.h.b16 %v71
    %v141 = vunpack.c.l.b16 %v72
    %v142 = vunpack.c.l.b16 %v73
    %v143 = vunpack.c.h.b16 %v73
    %v144 = vunpack.c.l.b16 %v74
    %v145 = vunpack.c.l.b16 %v75
    %v146 = vunpack.c.h.b16 %v75
    %v147 = vunpack.c.l.b16 %v76
    %v148 = vunpack.c.l.b16 %v77
    %v149 = vunpack.c.h.b16 %v77
    %v150 = vunpack.c.l.b16 %v78
    %v151 = vunpack.c.l.b16 %v79
    %v152 = vunpack.c.h.b16 %v79
    %v153 = vunpack.c.l.b16 %v80
    %v154 = vunpack.c.l.b16 %v81
    %v155 = vunpack.c.h.b16 %v81
    %v156 = vunpack.c.l.b16 %v82
    %v157 = vunpack.c.l.b16 %v83
    %v158 = vunpack.c.h.b16 %v83
    %v159 = vunpack.c.l.b16 %v84
    %v160 = vunpack.c.l.b16 %v85
    %v161 = vunpack.c.h.b16 %v85
    %v162 = vunpack.c.l.b16 %v86
    %v163 = vunpack.c.l.b16 %v87
    %v164 = vunpack.c.h.b16 %v87
    %v165 = vunpack.c.l.b16 %v88
    %v166 = vunpack.c.l.b16 %v89
    %v167 = vunpack.c.h.b16 %v89
    %v168 = vunpack.c.l.b16 %v90
    %v169 = vunpack.c.l.b16 %v91
    %v170 = vunpack.c.h.b16 %v91
    %v171 = vunpack.c.l.b16 %v92
    %v172 = vunpack.c.l.b16 %v93
    %v173 = vunpack.c.h.b16 %v93
    %v174 = vunpack.c.l.b16 %v94
    %v175 = vpack.c.b16 %v130, %v127
    %v176 = vpack.c.b16 %v131, %v128
    %v177 = vpack.c.b16 %v132, %v129
    %v178 = vpack.c.b16 %v136, %v133
    %v179 = vpack.c.b16 %v137, %v134
    %v180 = vpack.c.b16 %v138, %v135
    %v181 = vpack.c.b16 %v142, %v139
    %v182 = vpack.c.b16 %v143, %v140
    %v183 = vpack.c.b16 %v144, %v141
    %v184 = vpack.c.b16 %v148, %v145
    %v185 = vpack.c.b16 %v149, %v146
    %v186 = vpack.c.b16 %v150, %v147
    %v187 = vpack.c.b16 %v154, %v151
    %v188 = vpack.c.b16 %v155, %v152
    %v189 = vpack.c.b16 %v156, %v153
    %v190 = vpack.c.b16 %v160, %v157
    %v191 = vpack.c.b16 %v161, %v158
    %v192 = vpack.c.b16 %v162, %v159
    %v193 = vpack.c.b16 %v166, %v163
    %v194 = vpack.c.b16 %v167, %v164
    %v195 = vpack.c.b16 %v168, %v165
    %v196 = vpack.c.b16 %v172, %v169
    %v197 = vpack.c.b16 %v173, %v170
    %v198 = vpack.c.b16 %v174, %v171
    %223 = vmatprep.subr.bf16.mxu0 %v197
    %224 = vmatpush1.bf16.msra.mxu0 %v196
    %225 = vmatprep.subr.bf16.mxu0 %v194
    %226 = vmatpush1.bf16.msra.mxu0 %v193
    %227 = vmatprep.subr.bf16.mxu0 %v191
    %228 = vmatpush1.bf16.msra.mxu0 %v190
    %229 = vmatprep.subr.bf16.mxu0 %v188
    %230 = vmatpush1.bf16.msra.mxu0 %v187
    %231 = vmatprep.subr.bf16.mxu0 %v185
    %232 = vmatpush1.bf16.msra.mxu0 %v184
    %233 = vmatprep.subr.bf16.mxu0 %v182
    %234 = vmatpush1.bf16.msra.mxu0 %v181
    %235 = vmatprep.subr.bf16.mxu0 %v179
    %236 = vmatpush1.bf16.msra.mxu0 %v178
    %237 = vmatprep.subr.bf16.mxu0 %v176
    %238 = vmatpush1.bf16.msra.mxu0 %v175
    %239 = vmatprep.subr.bf16.mxu0 0
    %240 = vmatpush2.bf16.msra.mxu0 0
    %241 = vmatprep.subr.bf16.mxu0 0
    %242 = vmatpush2.bf16.msra.mxu0 0
    %243 = vmatprep.subr.bf16.mxu0 0
    %244 = vmatpush2.bf16.msra.mxu0 0
    %245 = vmatprep.subr.bf16.mxu0 0
    %246 = vmatpush2.bf16.msra.mxu0 0
    %247 = vmatprep.subr.bf16.mxu0 0
    %248 = vmatpush2.bf16.msra.mxu0 0
    %249 = vmatprep.subr.bf16.mxu0 0
    %250 = vmatpush2.bf16.msra.mxu0 0
    %251 = vmatprep.subr.bf16.mxu0 0
    %252 = vmatpush2.bf16.msra.mxu0 0
    %253 = vmatprep.subr.bf16.mxu0 0
    %254 = vmatpush2.bf16.msra.mxu0 0
    %255 = vmatprep.mubr.bf16.mxu0 0
    %256 = vmatmul.mubr.bf16.gmra.mxu0 %v62
    %v257 = vpop.f32.mrf.mxu0
    %v258 = vadd.f32 0.0, %v257
    %v259 = vpop.f32.mrf.mxu0
    %v260 = vadd.f32 0.0, %v259
    %v261 = vpop.f32.mrf.mxu0
    %v262 = vadd.f32 0.0, %v261
    %v263 = vpop.f32.mrf.mxu0
    %v264 = vadd.f32 0.0, %v263
    %265 = vdwg.mxu0
    %266 = vmatprep.subr.bf16.mxu0 0
    %267 = vmatpush1.bf16.msra.mxu0 %v198
    %268 = vmatprep.subr.bf16.mxu0 0
    %269 = vmatpush1.bf16.msra.mxu0 %v195
    %270 = vmatprep.subr.bf16.mxu0 0
    %271 = vmatpush1.bf16.msra.mxu0 %v192
    %272 = vmatprep.subr.bf16.mxu0 0
    %273 = vmatpush1.bf16.msra.mxu0 %v189
    %274 = vmatprep.subr.bf16.mxu0 0
    %275 = vmatpush1.bf16.msra.mxu0 %v186
    %276 = vmatprep.subr.bf16.mxu0 0
    %277 = vmatpush1.bf16.msra.mxu0 %v183
    %278 = vmatprep.subr.bf16.mxu0 0
    %279 = vmatpush1.bf16.msra.mxu0 %v180
    %280 = vmatprep.subr.bf16.mxu0 0
    %281 = vmatpush1.bf16.msra.mxu0 %v177
    %282 = vmatprep.subr.bf16.mxu0 0
    %283 = vmatpush2.bf16.msra.mxu0 0
    %284 = vmatprep.subr.bf16.mxu0 0
    %285 = vmatpush2.bf16.msra.mxu0 0
    %286 = vmatprep.subr.bf16.mxu0 0
    %287 = vmatpush2.bf16.msra.mxu0 0
    %288 = vmatprep.subr.bf16.mxu0 0
    %289 = vmatpush2.bf16.msra.mxu0 0
    %290 = vmatprep.subr.bf16.mxu0 0
    %291 = vmatpush2.bf16.msra.mxu0 0
    %292 = vmatprep.subr.bf16.mxu0 0
    %293 = vmatpush2.bf16.msra.mxu0 0
    %294 = vmatprep.subr.bf16.mxu0 0
    %295 = vmatpush2.bf16.msra.mxu0 0
    %296 = vmatprep.subr.bf16.mxu0 0
    %297 = vmatpush2.bf16.msra.mxu0 0
    %298 = vmatprep.mubr.bf16.mxu0 0
    %299 = vmatmul.mubr.bf16.gmra.mxu0 %v62
    %v300 = vpop.f32.mrf.mxu0
    %v301 = vadd.f32 0.0, %v300
    %v302 = vpop.f32.mrf.mxu0
    %v303 = vpop.f32.mrf.mxu0
    %v304 = vadd.f32 0.0, %v303
    %v305 = vpop.f32.mrf.mxu0
    %306 = vdwg.mxu0
    %v307 = vadd.f32 %v54, %v258
    %v308 = vadd.f32 %v55, %v260
    %v309 = vadd.f32 %v56, %v301
    %v310 = vadd.f32 %v57, %v262
    %v311 = vadd.f32 %v58, %v264
    %v312 = vadd.f32 %v59, %v304
    %313 = vst [vmem:[#allocation2] sm:$0xff] %v307
    %314 = vst [vmem:[#allocation2 + $0x8] sm:$0xff] %v308
    %315 = vst [vmem:[#allocation2 + $0x10] sm:$0xff] %v309
    %316 = vst [vmem:[#allocation2 + $0x18] sm:$0xff] %v310
    %317 = vst [vmem:[#allocation2 + $0x20] sm:$0xff] %v311
    %318 = vst [vmem:[#allocation2 + $0x28] sm:$0xff] %v312
    // Predicated region
    $region26: #{tpu_custom_call.1} parent=1 // pred_check
      %p319 = pneg %p44
    $region27: #{tpu_custom_call.1} parent=1 // pred_check_branch
      %321 = sbr.rel (%p319) target = $region29
    $region28: #{tpu_custom_call.1} parent=1 // pred_region
      %v322 = vld [vmem:[#allocation2] sm:$0xff]
      %v323 = vld [vmem:[#allocation2 + $0x8] sm:$0xff]
      %v324 = vld [vmem:[#allocation2 + $0x10] sm:$0xff]
      %v325 = vld [vmem:[#allocation2 + $0x18] sm:$0xff]
      %v326 = vld [vmem:[#allocation2 + $0x20] sm:$0xff]
      %v327 = vld [vmem:[#allocation2 + $0x28] sm:$0xff]
      %v328 = vld [vmem:[%s2] sm:$0x7]
      %v330 = vlaneseq
      %v331 = vshrl.u32 %v330, 7
      %v332 = vsub.s32 0, %v331
      %v333 = vrot.slane %v328, %v332
      %v334 = vlaneseq
      %v335 = vshrl.u32 %v334, 7
      %v336 = vsub.s32 1, %v335
      %v337 = vrot.slane %v328, %v336
      %v338 = vlaneseq
      %v339 = vshrl.u32 %v338, 7
      %v340 = vsub.s32 2, %v339
      %v341 = vrot.slane %v328, %v340
      %v345 = vadd.f32 %v322, %v333
      %v346 = vadd.f32 %v323, %v337
      %v347 = vadd.f32 %v324, %v341
      %v348 = vadd.f32 %v325, %v333
      %v349 = vadd.f32 %v326, %v337
      %v350 = vadd.f32 %v327, %v341
      %351 = vst [vmem:[#allocation8] sm:$0xff] %v345
      %352 = vst [vmem:[#allocation8 + $0x8] sm:$0xff] %v346
      %353 = vst [vmem:[#allocation8 + $0x10] sm:$0xff] %v347
      %354 = vst [vmem:[#allocation8 + $0x18] sm:$0xff] %v348
      %355 = vst [vmem:[#allocation8 + $0x20] sm:$0xff] %v349
      %356 = vst [vmem:[#allocation8 + $0x28] sm:$0xff] %v350
    $region29: #{tpu_custom_call.1} parent=1 // pred_fallthru
      _
    // Predicated region
    $region30: #{tpu_custom_call.1} parent=1 // pred_check
      _
    $region31: #{tpu_custom_call.1} parent=1 // pred_check_branch
      %358 = sbr.rel (0) target = $region33
    $region32: #{tpu_custom_call.1} parent=1 // pred_region
      %s360 = ssub.s32 768, 768
      %361 = vsyncadd [#allocation5], %s360
      %s362 = sshll.u32 [#allocation8], 4
      %s363 = int_to_ptr.vmem [resolvable:$true] %s362
      %368 = dma.vmem_to_hbm [thread:$0]  %s363, 768, %s3, [#allocation5], 384, 384, 24
    $region33: #{tpu_custom_call.1} parent=1 // pred_fallthru
      _
    // Predicated region
    $region34: #{tpu_custom_call.1} parent=1 // pred_check
      _
    $region35: #{tpu_custom_call.1} parent=1 // pred_check_branch
      %370 = sbr.rel (0) target = $region37
    $region36: #{tpu_custom_call.1} parent=1 // pred_region
      %371 = dma.done [#allocation5], 768
    $region37: #{tpu_custom_call.1} parent=1 // pred_fallthru
      _
    %372 = vsyncpa [#allocation4], 1
    %373 = vsyncpa [#allocation7], 1
    %374 = vsyncpa [#allocation5], 1

</llo_original>
